<compile_context>
chip_gen: v7x
topology: tpu7x:2x2x1
jax: 0.10.0
libtpu: 0.0.40
codegen_flags: <defaults>
</compile_context>

<pallas_src>
import functools
import math

import jax
import jax.numpy as jnp
from jax import lax
from jax.experimental import pallas as pl
from jax.experimental.pallas import tpu as pltpu


# ----------------------------------------------------------------------------
# Fused multi-output linear:  y_i = x @ W_i^T + b_i  for several (W_i, b_i)
# sharing the same input x.  One pallas_call, row-tiled grid -> x is DMA'd
# from HBM once for all projections and the pipeline double-buffers row tiles.
# ----------------------------------------------------------------------------
# 512-row f32 x tile + bf16 weights + (mostly bf16) outputs stays well under
# the 48 MiB limit below on every generation (v7x: 64 MiB physical per TC).
_TILE_ROWS = 512
_PROJ_VMEM_LIMIT = 48 * 1024 * 1024


def _multi_linear_kernel(*refs, n_out):
    x_ref = refs[0]
    w_refs = refs[1:1 + n_out]
    b_refs = refs[1 + n_out:1 + 2 * n_out]
    o_refs = refs[1 + 2 * n_out:]
    # Only the streamed activation tile is cast in-kernel (weights arrive
    # pre-cast to bf16 from the wrapper); f32 MXU accumulation.
    x = x_ref[...]
    if x.dtype != jnp.bfloat16:
        x = x.astype(jnp.bfloat16)
    for w_ref, b_ref, o_ref in zip(w_refs, b_refs, o_refs):
        y = lax.dot_general(x, w_ref[...], (((1,), (1,)), ((), ())),
                            preferred_element_type=jnp.float32)
        o_ref[...] = (y + b_ref[...]).astype(o_ref.dtype)


def multi_linear(x2d, weights, biases, out_dtypes=None, tile_rows=_TILE_ROWS):
    """Apply several nn.Linear layers (weights[i]: (Dout_i, Din)) to x2d."""
    n, din = x2d.shape
    n_out = len(weights)
    if out_dtypes is None:
        out_dtypes = [jnp.float32] * n_out
    # Pre-cast weights to bf16 once (outside the kernel) so the per-step VPU
    # cast and double the resident weight VMEM are gone.
    weights = [w if w.dtype == jnp.bfloat16 else w.astype(jnp.bfloat16)
               for w in weights]
    biases = [b.astype(jnp.float32).reshape(1, -1) for b in biases]

    tn = n if n <= tile_rows else tile_rows
    grid = (pl.cdiv(n, tn),)

    in_specs = [pl.BlockSpec((tn, din), lambda i: (i, 0))]
    in_specs += [pl.BlockSpec(w.shape, lambda i: (0, 0)) for w in weights]
    in_specs += [pl.BlockSpec(b.shape, lambda i: (0, 0)) for b in biases]
    out_specs = tuple(
        pl.BlockSpec((tn, w.shape[0]), lambda i: (i, 0)) for w in weights)
    out_shape = tuple(
        jax.ShapeDtypeStruct((n, w.shape[0]), dt)
        for w, dt in zip(weights, out_dtypes))

    return pl.pallas_call(
        functools.partial(_multi_linear_kernel, n_out=n_out),
        out_shape=out_shape,
        grid=grid,
        in_specs=in_specs,
        out_specs=out_specs,
        compiler_params=pltpu.CompilerParams(
            dimension_semantics=("parallel",),
            vmem_limit_bytes=_PROJ_VMEM_LIMIT,
        ),
    )(x2d, *weights, *biases)


# ----------------------------------------------------------------------------
# AnomalyAttention: grid over (batch, head-block), hb heads per step.
# ----------------------------------------------------------------------------
def _pick_head_block(n_heads, e, d, max_hb=4):
    """Heads processed per attention grid step.

    Legal if the q/k/v lane width (hb*E, hb*D) is either the full last dim
    (hb == H) or a multiple of 128 lanes.  Capped at max_hb=4: a fully
    unrolled 8-head body keeps too many (L,L) temporaries live (vreg spills);
    hb=4 still gives 128-lane-aligned DMA chunks and a second grid axis for
    megacore balancing.
    """
    candidates = []
    for hb in range(1, n_heads + 1):
        if n_heads % hb:
            continue
        if hb == n_heads or ((hb * e) % 128 == 0 and (hb * d) % 128 == 0):
            candidates.append(hb)
    capped = [hb for hb in candidates if hb <= max_hb]
    return max(capped) if capped else min(candidates)


def _anomaly_attention_kernel(q_ref, k_ref, v_ref, sig_ref, nd2_ref,
                              out_ref, series_ref, prior_ref, sig_out_ref,
                              *, hb, e, d):
    """One (batch, head-block) step.

    q_ref/k_ref: (1, L, hb*e) bf16 (q pre-scaled by 1/sqrt(E) via its weights)
    v_ref:       (1, L, hb*d) bf16
    sig_ref:     (1, hb, L, 1) f32
    nd2_ref:     (L, L) grid-invariant  -(|i-j|^2)/2
    out_ref:     (1, L, hb*d) bf16   series/prior: (1, hb, L, L) f32
    sig_out_ref: (1, hb, L, 1) f32
    """
    inv_sqrt_2pi = 1.0 / math.sqrt(2.0 * math.pi)
    log3 = math.log(3.0)
    nd2 = nd2_ref[...]                                      # (L, L)

    for h in range(hb):                                     # static, hb <= 4
        q = q_ref[0, :, h * e:(h + 1) * e]                  # (L, E) bf16
        k = k_ref[0, :, h * e:(h + 1) * e]                  # (L, E) bf16
        v = v_ref[0, :, h * d:(h + 1) * d]                  # (L, D) bf16
        sig = sig_ref[0, h]                                 # (L, 1) f32

        # scores = (q/sqrt(E)) @ k^T ; softmax over the key axis.
        scores = lax.dot_general(q, k, (((1,), (1,)), ((), ())),
                                 preferred_element_type=jnp.float32)
        smax = jnp.max(scores, axis=-1, keepdims=True)
        ex = jnp.exp(scores - smax)
        inv_den = pl.reciprocal(jnp.sum(ex, axis=-1, keepdims=True),
                                approx=True)                # (L, 1), EUP
        series = ex * inv_den                               # (L, L) f32

        # sigma transform: sigmoid(sigma*5) + 1e-5 ; 3**sigma - 1.
        s = jax.nn.sigmoid(sig * 5.0) + 1e-5
        s = jnp.exp(s * log3) - 1.0                         # (L, 1) f32
        # Exact reciprocal: inv_s enters the Gaussian exponent squared and is
        # multiplied by up to ~0.5*(L-1)^2, which amplifies approx error.
        inv_s = 1.0 / s                                     # (L, 1)

        # Gaussian prior over |i - j| (sigma broadcast along the key axis).
        prior = (inv_sqrt_2pi * inv_s) * jnp.exp(nd2 * (inv_s * inv_s))

        # Per-head store: bounds live ranges (no 8-head concat / spills).
        out_ref[0, :, h * d:(h + 1) * d] = jnp.dot(
            series.astype(jnp.bfloat16), v,
            preferred_element_type=jnp.float32).astype(out_ref.dtype)
        series_ref[0, h] = series
        prior_ref[0, h] = prior
        sig_out_ref[0, h] = s


def pallas_anomaly_attention(q_blhe, k_blhe, v_blhd, sig_bhl1, n_heads):
    B, L, he = q_blhe.shape
    S = k_blhe.shape[1]
    assert S == L, "Anomaly attention assumes L == S (window size)"
    e = he // n_heads
    d = v_blhd.shape[-1] // n_heads
    hb = _pick_head_block(n_heads, e, d)
    n_hblk = n_heads // hb

    # Grid-invariant -(|i-j|^2)/2: computed once here, DMA'd once (same block
    # index every step), never re-built inside the kernel.
    idx = jnp.arange(L, dtype=jnp.float32)
    dist = idx[:, None] - idx[None, :]
    neg_half_dist2 = -0.5 * dist * dist                     # (L, L)

    out_shapes = (
        jax.ShapeDtypeStruct((B, L, n_heads * d), jnp.bfloat16),  # attn out
        jax.ShapeDtypeStruct((B, n_heads, L, L), jnp.float32),    # series
        jax.ShapeDtypeStruct((B, n_heads, L, L), jnp.float32),    # prior
        jax.ShapeDtypeStruct((B, n_heads, L, 1), jnp.float32),    # sigma (pre-broadcast)
    )
    kernel = functools.partial(_anomaly_attention_kernel, hb=hb, e=e, d=d)

    return pl.pallas_call(
        kernel,
        out_shape=out_shapes,
        grid=(B, n_hblk),
        in_specs=[
            pl.BlockSpec((1, L, hb * e), lambda b, h: (b, 0, h)),
            pl.BlockSpec((1, L, hb * e), lambda b, h: (b, 0, h)),
            pl.BlockSpec((1, L, hb * d), lambda b, h: (b, 0, h)),
            pl.BlockSpec((1, hb, L, 1), lambda b, h: (b, h, 0, 0)),
            pl.BlockSpec((L, L), lambda b, h: (0, 0)),
        ],
        out_specs=(
            pl.BlockSpec((1, L, hb * d), lambda b, h: (b, 0, h)),
            pl.BlockSpec((1, hb, L, L), lambda b, h: (b, h, 0, 0)),
            pl.BlockSpec((1, hb, L, L), lambda b, h: (b, h, 0, 0)),
            pl.BlockSpec((1, hb, L, 1), lambda b, h: (b, h, 0, 0)),
        ),
        compiler_params=pltpu.CompilerParams(
            dimension_semantics=("parallel", "parallel")),
    )(q_blhe, k_blhe, v_blhd, sig_bhl1, neg_half_dist2)


# ----------------------------------------------------------------------------
# AttentionLayer forward (projections + anomaly attention + out projection)
# ----------------------------------------------------------------------------
def init_params(key, d_model, n_heads, d_keys=None, d_values=None):
    d_keys = d_keys or d_model // n_heads
    d_values = d_values or d_model // n_heads
    ks = jax.random.split(key, 10)
    scale = 0.02

    def w(k, shape):
        return (scale * jax.random.normal(k, shape)).astype(jnp.float32)

    return {
        "n_heads": n_heads,
        "wq": w(ks[0], (d_keys * n_heads, d_model)),
        "bq": w(ks[1], (d_keys * n_heads,)),
        "wk": w(ks[2], (d_keys * n_heads, d_model)),
        "bk": w(ks[3], (d_keys * n_heads,)),
        "wv": w(ks[4], (d_values * n_heads, d_model)),
        "bv": w(ks[5], (d_values * n_heads,)),
        "ws": w(ks[6], (n_heads, d_model)),
        "bs": w(ks[7], (n_heads,)),
        "wo": w(ks[8], (d_model, d_values * n_heads)),
        "bo": w(ks[9], (d_model,)),
    }


def attention_layer_forward(params, queries, keys, values, attn_mask=None):
    # TODO(synk): attn_mask (TriangularCausalMask / mask_flag=True) ignored —
    # the Anomaly-Transformer encoder uses mask_flag=False.
    B, L, Dm = queries.shape
    _, S, _ = keys.shape
    H = params["n_heads"]
    HE = params["wq"].shape[0]
    HD = params["wv"].shape[0]
    E = HE // H
    D = HD // H

    # Fold 1/sqrt(E) into the query projection (exactly equivalent to scaling
    # the scores), so the attention kernel never touches the (L, L) scale.
    q_scale = 1.0 / math.sqrt(float(E))
    wq_s = params["wq"] * q_scale
    bq_s = params["bq"] * q_scale

    bf16 = jnp.bfloat16
    if (queries is keys) and (queries is values):
        # Self-attention fast path (how the Anomaly Transformer uses this
        # layer): ONE fused projection kernel — x is read from HBM once for
        # q, k, v and sigma.  q/k/v emitted as bf16; sigma stays f32.
        q2, k2, v2, s2 = multi_linear(
            queries.reshape(B * L, Dm),
            [wq_s, params["wk"], params["wv"], params["ws"]],
            [bq_s, params["bk"], params["bv"], params["bs"]],
            out_dtypes=[bf16, bf16, bf16, jnp.float32],
        )
    else:
        # General path: q & sigma share `queries` (fused); k and v on their
        # own tensors.
        q2, s2 = multi_linear(queries.reshape(B * L, Dm),
                              [wq_s, params["ws"]],
                              [bq_s, params["bs"]],
                              out_dtypes=[bf16, jnp.float32])
        (k2,) = multi_linear(keys.reshape(B * S, Dm),
                             [params["wk"]], [params["bk"]],
                             out_dtypes=[bf16])
        (v2,) = multi_linear(values.reshape(B * S, Dm),
                             [params["wv"]], [params["bv"]],
                             out_dtypes=[bf16])

    # Head-sliced layouts with NO (B, L, H, E) -> (B, H, L, E) transposes:
    # q/k/v stay (B, L, H*E); the attention BlockSpec picks head chunks off
    # the last (lane) dim.  Only sigma (H values/token, ~E x smaller) gets a
    # small transpose to (B, H, L, 1).
    q3 = q2.reshape(B, L, HE)
    k3 = k2.reshape(B, S, HE)
    v3 = v2.reshape(B, S, HD)
    sig = s2.reshape(B, L, H).transpose(0, 2, 1)[..., None]      # (B, H, L, 1)

    out_blhd, series, prior, sigma_small = pallas_anomaly_attention(
        q3, k3, v3, sig, n_heads=H)

    # out_blhd is already (B, L, H*D) (bf16) — straight into the out
    # projection, no transpose / extra cast pass.
    (out2,) = multi_linear(out_blhd.reshape(B * L, HD),
                           [params["wo"]], [params["bo"]],
                           out_dtypes=[jnp.float32])
    out = out2.reshape(B, L, Dm)

    # Match the reference module's (B, H, L, L) sigma output; the broadcast
    # is done outside the kernel so the kernel writes L (not L*L) values per
    # (head, row).
    sigma = jnp.broadcast_to(sigma_small, (B, H, L, L))
    return out, series, prior, sigma


# ----------------------------------------------------------------------------
# Pure-JAX reference (mirrors the PyTorch AttentionLayer + AnomalyAttention)
# ----------------------------------------------------------------------------
def reference_forward(params, queries, keys, values):
    B, L, _ = queries.shape
    S = keys.shape[1]
    H = params["n_heads"]
    q = queries @ params["wq"].T + params["bq"]
    k = keys @ params["wk"].T + params["bk"]
    v = values @ params["wv"].T + params["bv"]
    sig = queries @ params["ws"].T + params["bs"]                # (B, L, H)
    E = q.shape[-1] // H
    D = v.shape[-1] // H
    q = q.reshape(B, L, H, E)
    k = k.reshape(B, S, H, E)
    v = v.reshape(B, S, H, D)
    scores = jnp.einsum("blhe,bshe->bhls", q, k)
    attn = scores / math.sqrt(E)
    series = jax.nn.softmax(attn, axis=-1)
    s = jnp.transpose(sig, (0, 2, 1))                            # (B, H, L)
    s = jax.nn.sigmoid(s * 5.0) + 1e-5
    s = jnp.power(3.0, s) - 1.0
    sigma = jnp.broadcast_to(s[..., None], (B, H, L, L))
    idx = jnp.arange(L, dtype=jnp.float32)
    dist = jnp.abs(idx[:, None] - idx[None, :])
    prior = (1.0 / (math.sqrt(2.0 * math.pi) * sigma)
             * jnp.exp(-(dist ** 2) / 2.0 / (sigma ** 2)))
    out = jnp.einsum("bhls,bshd->blhd", series, v).reshape(B, L, H * D)
    out = out @ params["wo"].T + params["bo"]
    return out, series, prior, sigma


if __name__ == "__main__":
    B, L, d_model, n_heads = 2, 8, 32, 4

    key = jax.random.PRNGKey(0)
    k_param, k_q, k_k, k_v = jax.random.split(key, 4)
    params = init_params(k_param, d_model, n_heads)

    x = jax.random.normal(k_q, (B, L, d_model), dtype=jnp.float32)
    keys_in = jax.random.normal(k_k, (B, L, d_model), dtype=jnp.float32)
    values_in = jax.random.normal(k_v, (B, L, d_model), dtype=jnp.float32)

    def check(name, got, want, tol=5e-2):
        err = float(jnp.max(jnp.abs(got.astype(jnp.float32) - want)))
        assert err < tol, f"{name}: max abs err {err}"

    # 1) Self-attention path (queries is keys is values): fully fused projections.
    outs = attention_layer_forward(params, x, x, x, attn_mask=None)
    jax.block_until_ready(outs)
    assert outs[0].shape == (B, L, d_model)
    assert outs[1].shape == (B, n_heads, L, L)
    assert outs[2].shape == (B, n_heads, L, L)
    assert outs[3].shape == (B, n_heads, L, L)
    refs = reference_forward(params, x, x, x)
    for name, got, want in zip(("out", "series", "prior", "sigma"), outs, refs):
        check("self/" + name, got, want)

    # 2) General path (distinct q / k / v tensors).
    outs2 = attention_layer_forward(params, x, keys_in, values_in, attn_mask=None)
    jax.block_until_ready(outs2)
    refs2 = reference_forward(params, x, keys_in, values_in)
    for name, got, want in zip(("out", "series", "prior", "sigma"), outs2, refs2):
        check("cross/" + name, got, want)

    print("KERNEL_OK")
</pallas_src>

<mosaic_0001>
module attributes {stable_mosaic.version = 11 : i64} {
  func.func @_multi_linear_kernel(%arg0: i32, %arg1: memref<16x32xf32, #tpu.memory_space<vmem>>, %arg2: memref<32x32xbf16, #tpu.memory_space<vmem>>, %arg3: memref<32x32xbf16, #tpu.memory_space<vmem>>, %arg4: memref<32x32xbf16, #tpu.memory_space<vmem>>, %arg5: memref<4x32xbf16, #tpu.memory_space<vmem>>, %arg6: memref<1x32xf32, #tpu.memory_space<vmem>>, %arg7: memref<1x32xf32, #tpu.memory_space<vmem>>, %arg8: memref<1x32xf32, #tpu.memory_space<vmem>>, %arg9: memref<1x4xf32, #tpu.memory_space<vmem>>, %arg10: memref<16x32xbf16, #tpu.memory_space<vmem>>, %arg11: memref<16x32xbf16, #tpu.memory_space<vmem>>, %arg12: memref<16x32xbf16, #tpu.memory_space<vmem>>, %arg13: memref<16x4xf32, #tpu.memory_space<vmem>>) attributes {dimension_semantics = [#tpu.dimension_semantics<parallel>], iteration_bounds = array<i64: 1>, scalar_prefetch = 0 : i64, scratch_operands = 0 : i64, tpu.core_type = #tpu.core_type<tc>, window_params = [{transform_indices = @transform_0, window_bounds = array<i64: 16, 32>}, {pipeline_mode = #tpu.pipeline_mode<synchronous>, transform_indices = @transform_1, window_bounds = array<i64: 32, 32>}, {pipeline_mode = #tpu.pipeline_mode<synchronous>, transform_indices = @transform_2, window_bounds = array<i64: 32, 32>}, {pipeline_mode = #tpu.pipeline_mode<synchronous>, transform_indices = @transform_3, window_bounds = array<i64: 32, 32>}, {pipeline_mode = #tpu.pipeline_mode<synchronous>, transform_indices = @transform_4, window_bounds = array<i64: 4, 32>}, {pipeline_mode = #tpu.pipeline_mode<synchronous>, transform_indices = @transform_5, window_bounds = array<i64: 1, 32>}, {pipeline_mode = #tpu.pipeline_mode<synchronous>, transform_indices = @transform_6, window_bounds = array<i64: 1, 32>}, {pipeline_mode = #tpu.pipeline_mode<synchronous>, transform_indices = @transform_7, window_bounds = array<i64: 1, 32>}, {pipeline_mode = #tpu.pipeline_mode<synchronous>, transform_indices = @transform_8, window_bounds = array<i64: 1, 4>}, {transform_indices = @transform_9, window_bounds = array<i64: 16, 32>}, {transform_indices = @transform_10, window_bounds = array<i64: 16, 32>}, {transform_indices = @transform_11, window_bounds = array<i64: 16, 32>}, {transform_indices = @transform_12, window_bounds = array<i64: 16, 4>}]} {
    %c0 = arith.constant 0 : index
    %c0_0 = arith.constant 0 : index
    %0 = vector.load %arg1[%c0, %c0_0] : memref<16x32xf32, #tpu.memory_space<vmem>>, vector<16x32xf32>
    %1 = arith.truncf %0 : vector<16x32xf32> to vector<16x32xbf16>
    %c0_1 = arith.constant 0 : index
    %c0_2 = arith.constant 0 : index
    %2 = vector.load %arg2[%c0_1, %c0_2] : memref<32x32xbf16, #tpu.memory_space<vmem>>, vector<32x32xbf16>
    %cst = arith.constant dense<0.000000e+00> : vector<16x32xf32>
    %3 = tpu.matmul %1, %2, %cst {dimension_numbers = #tpu.dot_dimension_numbers<[1], [1], [0], [0], [0, 0, 1, 0], [], []>} : vector<16x32xbf16>, vector<32x32xbf16>, vector<16x32xf32> -> vector<16x32xf32>
    %c0_3 = arith.constant 0 : index
    %c0_4 = arith.constant 0 : index
    %4 = vector.load %arg6[%c0_3, %c0_4] : memref<1x32xf32, #tpu.memory_space<vmem>>, vector<1x32xf32>
    %5 = vector.broadcast %4 : vector<1x32xf32> to vector<16x32xf32>
    %6 = arith.addf %3, %5 : vector<16x32xf32>
    %7 = arith.truncf %6 : vector<16x32xf32> to vector<16x32xbf16>
    %c0_5 = arith.constant 0 : index
    %c0_6 = arith.constant 0 : index
    %8 = vector.load %arg10[%c0_5, %c0_6] : memref<16x32xbf16, #tpu.memory_space<vmem>>, vector<16x32xbf16>
    tpu.vector_store %arg10[%c0_5, %c0_6], %7 {strides = array<i32>} : memref<16x32xbf16, #tpu.memory_space<vmem>>, vector<16x32xbf16>,
    %c0_7 = arith.constant 0 : index
    %c0_8 = arith.constant 0 : index
    %9 = vector.load %arg3[%c0_7, %c0_8] : memref<32x32xbf16, #tpu.memory_space<vmem>>, vector<32x32xbf16>
    %cst_9 = arith.constant dense<0.000000e+00> : vector<16x32xf32>
    %10 = tpu.matmul %1, %9, %cst_9 {dimension_numbers = #tpu.dot_dimension_numbers<[1], [1], [0], [0], [0, 0, 1, 0], [], []>} : vector<16x32xbf16>, vector<32x32xbf16>, vector<16x32xf32> -> vector<16x32xf32>
    %c0_10 = arith.constant 0 : index
    %c0_11 = arith.constant 0 : index
    %11 = vector.load %arg7[%c0_10, %c0_11] : memref<1x32xf32, #tpu.memory_space<vmem>>, vector<1x32xf32>
    %12 = vector.broadcast %11 : vector<1x32xf32> to vector<16x32xf32>
    %13 = arith.addf %10, %12 : vector<16x32xf32>
    %14 = arith.truncf %13 : vector<16x32xf32> to vector<16x32xbf16>
    %c0_12 = arith.constant 0 : index
    %c0_13 = arith.constant 0 : index
    %15 = vector.load %arg11[%c0_12, %c0_13] : memref<16x32xbf16, #tpu.memory_space<vmem>>, vector<16x32xbf16>
    tpu.vector_store %arg11[%c0_12, %c0_13], %14 {strides = array<i32>} : memref<16x32xbf16, #tpu.memory_space<vmem>>, vector<16x32xbf16>,
    %c0_14 = arith.constant 0 : index
    %c0_15 = arith.constant 0 : index
    %16 = vector.load %arg4[%c0_14, %c0_15] : memref<32x32xbf16, #tpu.memory_space<vmem>>, vector<32x32xbf16>
    %cst_16 = arith.constant dense<0.000000e+00> : vector<16x32xf32>
    %17 = tpu.matmul %1, %16, %cst_16 {dimension_numbers = #tpu.dot_dimension_numbers<[1], [1], [0], [0], [0, 0, 1, 0], [], []>} : vector<16x32xbf16>, vector<32x32xbf16>, vector<16x32xf32> -> vector<16x32xf32>
    %c0_17 = arith.constant 0 : index
    %c0_18 = arith.constant 0 : index
    %18 = vector.load %arg8[%c0_17, %c0_18] : memref<1x32xf32, #tpu.memory_space<vmem>>, vector<1x32xf32>
    %19 = vector.broadcast %18 : vector<1x32xf32> to vector<16x32xf32>
    %20 = arith.addf %17, %19 : vector<16x32xf32>
    %21 = arith.truncf %20 : vector<16x32xf32> to vector<16x32xbf16>
    %c0_19 = arith.constant 0 : index
    %c0_20 = arith.constant 0 : index
    %22 = vector.load %arg12[%c0_19, %c0_20] : memref<16x32xbf16, #tpu.memory_space<vmem>>, vector<16x32xbf16>
    tpu.vector_store %arg12[%c0_19, %c0_20], %21 {strides = array<i32>} : memref<16x32xbf16, #tpu.memory_space<vmem>>, vector<16x32xbf16>,
    %c0_21 = arith.constant 0 : index
    %c0_22 = arith.constant 0 : index
    %23 = vector.load %arg5[%c0_21, %c0_22] : memref<4x32xbf16, #tpu.memory_space<vmem>>, vector<4x32xbf16>
    %cst_23 = arith.constant dense<0.000000e+00> : vector<16x4xf32>
    %24 = tpu.matmul %1, %23, %cst_23 {dimension_numbers = #tpu.dot_dimension_numbers<[1], [1], [0], [0], [0, 0, 1, 0], [], []>} : vector<16x32xbf16>, vector<4x32xbf16>, vector<16x4xf32> -> vector<16x4xf32>
    %c0_24 = arith.constant 0 : index
    %c0_25 = arith.constant 0 : index
    %25 = vector.load %arg9[%c0_24, %c0_25] : memref<1x4xf32, #tpu.memory_space<vmem>>, vector<1x4xf32>
    %26 = vector.broadcast %25 : vector<1x4xf32> to vector<16x4xf32>
    %27 = arith.addf %24, %26 : vector<16x4xf32>
    %c0_26 = arith.constant 0 : index
    %c0_27 = arith.constant 0 : index
    %28 = vector.load %arg13[%c0_26, %c0_27] : memref<16x4xf32, #tpu.memory_space<vmem>>, vector<16x4xf32>
    tpu.vector_store %arg13[%c0_26, %c0_27], %27 {strides = array<i32>} : memref<16x4xf32, #tpu.memory_space<vmem>>, vector<16x4xf32>,
    return
  }
  func.func @transform_0(%arg0: i32) -> (i32, i32) {
    %c0_i32 = arith.constant 0 : i32
    %c0_i32_0 = arith.constant 0 : i32
    return %arg0, %c0_i32 : i32, i32
  }
  func.func @transform_1(%arg0: i32) -> (i32, i32) {
    %c0_i32 = arith.constant 0 : i32
    %c0_i32_0 = arith.constant 0 : i32
    %c0_i32_1 = arith.constant 0 : i32
    return %c0_i32, %c0_i32_0 : i32, i32
  }
  func.func @transform_2(%arg0: i32) -> (i32, i32) {
    %c0_i32 = arith.constant 0 : i32
    %c0_i32_0 = arith.constant 0 : i32
    %c0_i32_1 = arith.constant 0 : i32
    return %c0_i32, %c0_i32_0 : i32, i32
  }
  func.func @transform_3(%arg0: i32) -> (i32, i32) {
    %c0_i32 = arith.constant 0 : i32
    %c0_i32_0 = arith.constant 0 : i32
    %c0_i32_1 = arith.constant 0 : i32
    return %c0_i32, %c0_i32_0 : i32, i32
  }
  func.func @transform_4(%arg0: i32) -> (i32, i32) {
    %c0_i32 = arith.constant 0 : i32
    %c0_i32_0 = arith.constant 0 : i32
    %c0_i32_1 = arith.constant 0 : i32
    return %c0_i32, %c0_i32_0 : i32, i32
  }
  func.func @transform_5(%arg0: i32) -> (i32, i32) {
    %c0_i32 = arith.constant 0 : i32
    %c0_i32_0 = arith.constant 0 : i32
    %c0_i32_1 = arith.constant 0 : i32
    return %c0_i32, %c0_i32_0 : i32, i32
  }
  func.func @transform_6(%arg0: i32) -> (i32, i32) {
    %c0_i32 = arith.constant 0 : i32
    %c0_i32_0 = arith.constant 0 : i32
    %c0_i32_1 = arith.constant 0 : i32
    return %c0_i32, %c0_i32_0 : i32, i32
  }
  func.func @transform_7(%arg0: i32) -> (i32, i32) {
    %c0_i32 = arith.constant 0 : i32
    %c0_i32_0 = arith.constant 0 : i32
    %c0_i32_1 = arith.constant 0 : i32
    return %c0_i32, %c0_i32_0 : i32, i32
  }
  func.func @transform_8(%arg0: i32) -> (i32, i32) {
    %c0_i32 = arith.constant 0 : i32
    %c0_i32_0 = arith.constant 0 : i32
    %c0_i32_1 = arith.constant 0 : i32
    return %c0_i32, %c0_i32_0 : i32, i32
  }
  func.func @transform_9(%arg0: i32) -> (i32, i32) {
    %c0_i32 = arith.constant 0 : i32
    %c0_i32_0 = arith.constant 0 : i32
    return %arg0, %c0_i32 : i32, i32
  }
  func.func @transform_10(%arg0: i32) -> (i32, i32) {
    %c0_i32 = arith.constant 0 : i32
    %c0_i32_0 = arith.constant 0 : i32
    return %arg0, %c0_i32 : i32, i32
  }
  func.func @transform_11(%arg0: i32) -> (i32, i32) {
    %c0_i32 = arith.constant 0 : i32
    %c0_i32_0 = arith.constant 0 : i32
    return %arg0, %c0_i32 : i32, i32
  }
  func.func @transform_12(%arg0: i32) -> (i32, i32) {
    %c0_i32 = arith.constant 0 : i32
    %c0_i32_0 = arith.constant 0 : i32
    return %arg0, %c0_i32 : i32, i32
  }
}

</mosaic_0001>

<llo_original>
// kernel: tpu_custom_call.1
$region0: #{tpu_custom_call.1}
  #allocation0 [shape = 'u32[]', space=smem, size = 0x4, offset = 0x4, fixed_abs, tag = 'smem constant byte address 0x4 - core index']
  #allocation1 [shape = 'u32[144,128]{1,0:T(1,128)}', space=vmem, size = 0x12000, scoped, tag = 'internal scratch']
  %s0 = inlined_call_operand.hbm [shape: f32[16,32], index: 0, kind: input, shape index: {}]
  %s1 = inlined_call_operand.hbm [shape: bf16[32,32], index: 1, kind: input, shape index: {}]
  %s2 = inlined_call_operand.hbm [shape: bf16[32,32], index: 2, kind: input, shape index: {}]
  %s3 = inlined_call_operand.hbm [shape: bf16[32,32], index: 3, kind: input, shape index: {}]
  %s4 = inlined_call_operand.vmem [shape: bf16[4,32], index: 4, kind: input, shape index: {}]
  %s5 = inlined_call_operand.vmem [shape: f32[1,32], index: 5, kind: input, shape index: {}]
  %s6 = inlined_call_operand.vmem [shape: f32[1,32], index: 6, kind: input, shape index: {}]
  %s7 = inlined_call_operand.vmem [shape: f32[1,32], index: 7, kind: input, shape index: {}]
  %s8 = inlined_call_operand.vmem [shape: f32[1,4], index: 8, kind: input, shape index: {}]
  %s9 = inlined_call_operand.hbm [shape: bf16[16,32], index: 9, kind: output, shape index: {0}]
  %s10 = inlined_call_operand.hbm [shape: bf16[16,32], index: 10, kind: output, shape index: {1}]
  %s11 = inlined_call_operand.hbm [shape: bf16[16,32], index: 11, kind: output, shape index: {2}]
  %s12 = inlined_call_operand.vmem [shape: f32[16,4], index: 12, kind: output, shape index: {3}]
  %13 = xla_tuple %s9, %s10, %s11, %s12
  %s14 = sld [smem:[#allocation0]]
  $region86: #{tpu_custom_call.1} parent=0
    _
  %s16 = ssub.s32 1, %s14
  %s17 = scalar_select 0, %s16, %s14
  $region1: #{tpu_custom_call.1} parent=0
    #allocation2 [shape = 'u8[8192]{0}', space=vmem, size = 0x2000, scoped, tag = 'input window, operand 0, single buffered']
    #allocation3 [shape = 's32[1]{0}', space=sflag, size = 0x4, scoped, tag = 'scoped memory for tpu_custom_call.1']
    #allocation4 [shape = 's32[1]{0}', space=sflag, size = 0x4, scoped, tag = 'scoped memory for tpu_custom_call.1']
    #allocation5 [shape = 'u8[8192]{0}', space=vmem, size = 0x2000, scoped, tag = 'input window, operand 1, single buffered']
    #allocation6 [shape = 's32[1]{0}', space=sflag, size = 0x4, scoped, tag = 'scoped memory for tpu_custom_call.1']
    #allocation7 [shape = 'u8[8192]{0}', space=vmem, size = 0x2000, scoped, tag = 'input window, operand 2, single buffered']
    #allocation8 [shape = 'u8[8192]{0}', space=vmem, size = 0x2000, scoped, tag = 'input window, operand 3, single buffered']
    #allocation9 [shape = 's32[1]{0}', space=sflag, size = 0x4, scoped, tag = 'scoped memory for tpu_custom_call.1']
    #allocation10 [shape = 'u8[4096]{0}', space=vmem, size = 0x1000, scoped, tag = 'output window, operand 0, single buffered']
    #allocation11 [shape = 'u8[4096]{0}', space=vmem, size = 0x1000, scoped, tag = 'output window, operand 1, single buffered']
    #allocation12 [shape = 's32[1]{0}', space=sflag, size = 0x4, scoped, tag = 'scoped memory for tpu_custom_call.1']
    #allocation13 [shape = 'u8[4096]{0}', space=vmem, size = 0x1000, scoped, tag = 'output window, operand 2, single buffered']
    %18 = vsyncpa [#allocation3], 0
    %19 = vsyncpa [#allocation6], 0
    %20 = vsyncpa [#allocation9], 0
    %21 = vsyncpa [#allocation4], 0
    %22 = vsyncpa [#allocation12], 0
    // Predicated region
    $region2: #{tpu_custom_call.1} parent=1 // pred_check
      _
    $region3: #{tpu_custom_call.1} parent=1 // pred_check_branch
      %24 = sbr.rel (0) target = $region5
    $region4: #{tpu_custom_call.1} parent=1 // pred_region
      %s26 = ssub.s32 256, 256
      %27 = vsyncadd [#allocation3], %s26
      %s28 = sshll.u32 [#allocation2], 4
      %s29 = int_to_ptr.vmem [resolvable:$true] %s28
      %34 = dma.hbm_to_vmem [thread:$0]  %s0, 256, %s29, [#allocation3], 128, 128, 8
    $region5: #{tpu_custom_call.1} parent=1 // pred_fallthru
      _
    // Predicated region
    $region6: #{tpu_custom_call.1} parent=1 // pred_check
      _
    $region7: #{tpu_custom_call.1} parent=1 // pred_check_branch
      %36 = sbr.rel (0) target = $region9
    $region8: #{tpu_custom_call.1} parent=1 // pred_region
      %s38 = ssub.s32 256, 256
      %39 = vsyncadd [#allocation6], %s38
      %s40 = sshll.u32 [#allocation5], 4
      %s41 = int_to_ptr.vmem [resolvable:$true] %s40
      %46 = dma.hbm_to_vmem [thread:$0]  %s1, 256, %s41, [#allocation6], 64, 64, 4
    $region9: #{tpu_custom_call.1} parent=1 // pred_fallthru
      _
    // Predicated region
    $region10: #{tpu_custom_call.1} parent=1 // pred_check
      _
    $region11: #{tpu_custom_call.1} parent=1 // pred_check_branch
      %48 = sbr.rel (0) target = $region13
    $region12: #{tpu_custom_call.1} parent=1 // pred_region
      %s50 = ssub.s32 256, 256
      %51 = vsyncadd [#allocation6], %s50
      %s52 = sshll.u32 [#allocation7], 4
      %s53 = int_to_ptr.vmem [resolvable:$true] %s52
      %58 = dma.hbm_to_vmem [thread:$0]  %s2, 256, %s53, [#allocation6], 64, 64, 4
    $region13: #{tpu_custom_call.1} parent=1 // pred_fallthru
      _
    // Predicated region
    $region14: #{tpu_custom_call.1} parent=1 // pred_check
      _
    $region15: #{tpu_custom_call.1} parent=1 // pred_check_branch
      %60 = sbr.rel (0) target = $region17
    $region16: #{tpu_custom_call.1} parent=1 // pred_region
      %s62 = ssub.s32 256, 256
      %63 = vsyncadd [#allocation9], %s62
      %s64 = sshll.u32 [#allocation8], 4
      %s65 = int_to_ptr.vmem [resolvable:$true] %s64
      %70 = dma.hbm_to_vmem [thread:$0]  %s3, 256, %s65, [#allocation9], 64, 64, 4
    $region17: #{tpu_custom_call.1} parent=1 // pred_fallthru
      _
    // Predicated region
    $region18: #{tpu_custom_call.1} parent=1 // pred_check
      _
    $region19: #{tpu_custom_call.1} parent=1 // pred_check_branch
      %72 = sbr.rel (0) target = $region21
    $region20: #{tpu_custom_call.1} parent=1 // pred_region
      _
    $region21: #{tpu_custom_call.1} parent=1 // pred_fallthru
      _
    // Predicated region
    $region22: #{tpu_custom_call.1} parent=1 // pred_check
      _
    $region23: #{tpu_custom_call.1} parent=1 // pred_check_branch
      %74 = sbr.rel (0) target = $region25
    $region24: #{tpu_custom_call.1} parent=1 // pred_region
      _
    $region25: #{tpu_custom_call.1} parent=1 // pred_fallthru
      _
    // Predicated region
    $region26: #{tpu_custom_call.1} parent=1 // pred_check
      _
    $region27: #{tpu_custom_call.1} parent=1 // pred_check_branch
      %76 = sbr.rel (0) target = $region29
    $region28: #{tpu_custom_call.1} parent=1 // pred_region
      _
    $region29: #{tpu_custom_call.1} parent=1 // pred_fallthru
      _
    // Predicated region
    $region30: #{tpu_custom_call.1} parent=1 // pred_check
      _
    $region31: #{tpu_custom_call.1} parent=1 // pred_check_branch
      %78 = sbr.rel (0) target = $region33
    $region32: #{tpu_custom_call.1} parent=1 // pred_region
      _
    $region33: #{tpu_custom_call.1} parent=1 // pred_fallthru
      _
    // Predicated region
    $region34: #{tpu_custom_call.1} parent=1 // pred_check
      _
    $region35: #{tpu_custom_call.1} parent=1 // pred_check_branch
      %80 = sbr.rel (0) target = $region37
    $region36: #{tpu_custom_call.1} parent=1 // pred_region
      _
    $region37: #{tpu_custom_call.1} parent=1 // pred_fallthru
      _
    // Predicated region
    $region38: #{tpu_custom_call.1} parent=1 // pred_check
      _
    $region39: #{tpu_custom_call.1} parent=1 // pred_check_branch
      %82 = sbr.rel (0) target = $region41
    $region40: #{tpu_custom_call.1} parent=1 // pred_region
      %83 = dma.done [#allocation3], 256
    $region41: #{tpu_custom_call.1} parent=1 // pred_fallthru
      _
    // Predicated region
    $region42: #{tpu_custom_call.1} parent=1 // pred_check
      _
    $region43: #{tpu_custom_call.1} parent=1 // pred_check_branch
      %85 = sbr.rel (0) target = $region45
    $region44: #{tpu_custom_call.1} parent=1 // pred_region
      %86 = dma.done [#allocation6], 256
    $region45: #{tpu_custom_call.1} parent=1 // pred_fallthru
      _
    // Predicated region
    $region46: #{tpu_custom_call.1} parent=1 // pred_check
      _
    $region47: #{tpu_custom_call.1} parent=1 // pred_check_branch
      %88 = sbr.rel (0) target = $region49
    $region48: #{tpu_custom_call.1} parent=1 // pred_region
      %89 = dma.done [#allocation6], 256
    $region49: #{tpu_custom_call.1} parent=1 // pred_fallthru
      _
    // Predicated region
    $region50: #{tpu_custom_call.1} parent=1 // pred_check
      _
    $region51: #{tpu_custom_call.1} parent=1 // pred_check_branch
      %91 = sbr.rel (0) target = $region53
    $region52: #{tpu_custom_call.1} parent=1 // pred_region
      %92 = dma.done [#allocation9], 256
    $region53: #{tpu_custom_call.1} parent=1 // pred_fallthru
      _
    %v94 = vld [vmem:[#allocation2] sm:$0xff]
    %v95 = vld [vmem:[#allocation2 + $0x8] sm:$0xff]
    %v96 = vpack.c.bf16 %v95, %v94
    %v97 = vld [vmem:[#allocation5] sm:$0xf]
    %v98 = vld [vmem:[#allocation5 + $0x4] sm:$0xf]
    %v99 = vld [vmem:[#allocation5 + $0x8] sm:$0xf]
    %v100 = vld [vmem:[#allocation5 + $0xc] sm:$0xf]
    %v101 = vld [vmem:[%s5] sm:$0x1]
    %v103 = vlaneseq
    %v104 = vshrl.u32 %v103, 7
    %v105 = vsub.s32 0, %v104
    %v106 = vrot.slane %v101, %v105
    %v112 = vunpack.c.l.b16 %v97
    %v113 = vunpack.c.l.b16 %v98
    %v114 = vunpack.c.l.b16 %v99
    %v115 = vunpack.c.l.b16 %v100
    %v116 = vpack.c.b16 %v113, %v112
    %v117 = vpack.c.b16 %v115, %v114
    %vm118 = vcmask 261120
    %v120 = vsel %vm118, %v96, 0
    %v123 = vsel %vm118, %v116, 0
    %v126 = vsel %vm118, %v117, 0
    %128 = vmatprep.subr.bf16.mxu0 0
    %129 = vmatpush1.bf16.xpose.msra.mxu0 %v123
    %130 = vmatprep.subr.bf16.mxu0 0
    %131 = vmatpush1.bf16.xpose.msra.mxu0 %v126
    %132 = vmatprep.subr.bf16.mxu0 0
    %133 = vmatpush1.bf16.xpose.msra.mxu0 0
    %134 = vmatprep.subr.bf16.mxu0 0
    %135 = vmatpush1.bf16.xpose.msra.mxu0 0
    %136 = vmatprep.subr.bf16.mxu0 0
    %137 = vmatpush1.bf16.xpose.msra.mxu0 0
    %138 = vmatprep.subr.bf16.mxu0 0
    %139 = vmatpush1.bf16.xpose.msra.mxu0 0
    %140 = vmatprep.subr.bf16.mxu0 0
    %141 = vmatpush1.bf16.xpose.msra.mxu0 0
    %142 = vmatprep.subr.bf16.mxu0 0
    %143 = vmatpush1.bf16.xpose.msra.mxu0 0
    %144 = vmatprep.subr.bf16.mxu0 0
    %145 = vmatpush1.bf16.xpose.msra.mxu0 0
    %146 = vmatprep.subr.bf16.mxu0 0
    %147 = vmatpush1.bf16.xpose.msra.mxu0 0
    %148 = vmatprep.subr.bf16.mxu0 0
    %149 = vmatpush1.bf16.xpose.msra.mxu0 0
    %150 = vmatprep.subr.bf16.mxu0 0
    %151 = vmatpush1.bf16.xpose.msra.mxu0 0
    %152 = vmatprep.subr.bf16.mxu0 0
    %153 = vmatpush1.bf16.xpose.msra.mxu0 0
    %154 = vmatprep.subr.bf16.mxu0 0
    %155 = vmatpush1.bf16.xpose.msra.mxu0 0
    %156 = vmatprep.subr.bf16.mxu0 0
    %157 = vmatpush1.bf16.xpose.msra.mxu0 0
    %158 = vmatprep.subr.bf16.mxu0 0
    %159 = vmatpush1.bf16.xpose.msra.mxu0 0
    %160 = vmatprep.mubr.bf16.mxu0 0
    %161 = vmatmul.mubr.bf16.gmra.mrb[0].mxu0 %v120
    %v162 = vpop.f32.mrb[0].mxu0
    %v163 = vadd.f32 %v106, %v162
    %v164 = vpop.f32.mrb[0].mxu0
    %v165 = vpop.f32.mrb[0].mxu0
    %v166 = vadd.f32 %v106, %v165
    %v167 = vpop.f32.mrb[0].mxu0
    %168 = vdwg.mxu0
    %v169 = vpack.c.bf16 %v166, %v163
    %v171 = vunpack.c.l.b16 %v169
    %v172 = vunpack.c.h.b16 %v169
    %v173 = vpack.c.b16 %v171, %v171
    %v174 = vpack.c.b16 %v172, %v172
    %vm177 = vcmask 257024
    %178 = vst.msk [vmem:[#allocation10] sm:$0xf] %vm177, %v173
    %179 = vst.msk [vmem:[#allocation10 + $0x4] sm:$0xf] %vm177, %v174
    %v180 = vld [vmem:[#allocation7] sm:$0xf]
    %v181 = vld [vmem:[#allocation7 + $0x4] sm:$0xf]
    %v182 = vld [vmem:[#allocation7 + $0x8] sm:$0xf]
    %v183 = vld [vmem:[#allocation7 + $0xc] sm:$0xf]
    %v184 = vld [vmem:[%s6] sm:$0x1]
    %v186 = vlaneseq
    %v187 = vshrl.u32 %v186, 7
    %v188 = vsub.s32 0, %v187
    %v189 = vrot.slane %v184, %v188
    %v195 = vunpack.c.l.b16 %v180
    %v196 = vunpack.c.l.b16 %v181
    %v197 = vunpack.c.l.b16 %v182
    %v198 = vunpack.c.l.b16 %v183
    %v199 = vpack.c.b16 %v196, %v195
    %v200 = vpack.c.b16 %v198, %v197
    %v202 = vsel %vm118, %v199, 0
    %v205 = vsel %vm118, %v200, 0
    %207 = vmatprep.subr.bf16.mxu0 0
    %208 = vmatpush1.bf16.xpose.msra.mxu0 %v202
    %209 = vmatprep.subr.bf16.mxu0 0
    %210 = vmatpush1.bf16.xpose.msra.mxu0 %v205
    %211 = vmatprep.subr.bf16.mxu0 0
    %212 = vmatpush1.bf16.xpose.msra.mxu0 0
    %213 = vmatprep.subr.bf16.mxu0 0
    %214 = vmatpush1.bf16.xpose.msra.mxu0 0
    %215 = vmatprep.subr.bf16.mxu0 0
    %216 = vmatpush1.bf16.xpose.msra.mxu0 0
    %217 = vmatprep.subr.bf16.mxu0 0
    %218 = vmatpush1.bf16.xpose.msra.mxu0 0
    %219 = vmatprep.subr.bf16.mxu0 0
    %220 = vmatpush1.bf16.xpose.msra.mxu0 0
    %221 = vmatprep.subr.bf16.mxu0 0
    %222 = vmatpush1.bf16.xpose.msra.mxu0 0
    %223 = vmatprep.subr.bf16.mxu0 0
    %224 = vmatpush1.bf16.xpose.msra.mxu0 0
    %225 = vmatprep.subr.bf16.mxu0 0
    %226 = vmatpush1.bf16.xpose.msra.mxu0 0
    %227 = vmatprep.subr.bf16.mxu0 0
    %228 = vmatpush1.bf16.xpose.msra.mxu0 0
    %229 = vmatprep.subr.bf16.mxu0 0
    %230 = vmatpush1.bf16.xpose.msra.mxu0 0
    %231 = vmatprep.subr.bf16.mxu0 0
    %232 = vmatpush1.bf16.xpose.msra.mxu0 0
    %233 = vmatprep.subr.bf16.mxu0 0
    %234 = vmatpush1.bf16.xpose.msra.mxu0 0
    %235 = vmatprep.subr.bf16.mxu0 0
    %236 = vmatpush1.bf16.xpose.msra.mxu0 0
    %237 = vmatprep.subr.bf16.mxu0 0
    %238 = vmatpush1.bf16.xpose.msra.mxu0 0
    %239 = vmatprep.mubr.bf16.mxu0 0
    %240 = vmatmul.mubr.bf16.gmra.mrb[0].mxu0 %v120
    %v241 = vpop.f32.mrb[0].mxu0
    %v242 = vadd.f32 %v189, %v241
    %v243 = vpop.f32.mrb[0].mxu0
    %v244 = vpop.f32.mrb[0].mxu0
    %v245 = vadd.f32 %v189, %v244
    %v246 = vpop.f32.mrb[0].mxu0
    %247 = vdwg.mxu0
    %v248 = vpack.c.bf16 %v245, %v242
    %v250 = vunpack.c.l.b16 %v248
    %v251 = vunpack.c.h.b16 %v248
    %v252 = vpack.c.b16 %v250, %v250
    %v253 = vpack.c.b16 %v251, %v251
    %256 = vst.msk [vmem:[#allocation11] sm:$0xf] %vm177, %v252
    %257 = vst.msk [vmem:[#allocation11 + $0x4] sm:$0xf] %vm177, %v253
    %v258 = vld [vmem:[#allocation8] sm:$0xf]
    %v259 = vld [vmem:[#allocation8 + $0x4] sm:$0xf]
    %v260 = vld [vmem:[#allocation8 + $0x8] sm:$0xf]
    %v261 = vld [vmem:[#allocation8 + $0xc] sm:$0xf]
    %v262 = vld [vmem:[%s7] sm:$0x1]
    %v264 = vlaneseq
    %v265 = vshrl.u32 %v264, 7
    %v266 = vsub.s32 0, %v265
    %v267 = vrot.slane %v262, %v266
    %v273 = vunpack.c.l.b16 %v258
    %v274 = vunpack.c.l.b16 %v259
    %v275 = vunpack.c.l.b16 %v260
    %v276 = vunpack.c.l.b16 %v261
    %v277 = vpack.c.b16 %v274, %v273
    %v278 = vpack.c.b16 %v276, %v275
    %v280 = vsel %vm118, %v277, 0
    %v283 = vsel %vm118, %v278, 0
    %285 = vmatprep.subr.bf16.mxu0 0
    %286 = vmatpush1.bf16.xpose.msra.mxu0 %v280
    %287 = vmatprep.subr.bf16.mxu0 0
    %288 = vmatpush1.bf16.xpose.msra.mxu0 %v283
    %289 = vmatprep.subr.bf16.mxu0 0
    %290 = vmatpush1.bf16.xpose.msra.mxu0 0
    %291 = vmatprep.subr.bf16.mxu0 0
    %292 = vmatpush1.bf16.xpose.msra.mxu0 0
    %293 = vmatprep.subr.bf16.mxu0 0
    %294 = vmatpush1.bf16.xpose.msra.mxu0 0
    %295 = vmatprep.subr.bf16.mxu0 0
    %296 = vmatpush1.bf16.xpose.msra.mxu0 0
    %297 = vmatprep.subr.bf16.mxu0 0
    %298 = vmatpush1.bf16.xpose.msra.mxu0 0
    %299 = vmatprep.subr.bf16.mxu0 0
    %300 = vmatpush1.bf16.xpose.msra.mxu0 0
    %301 = vmatprep.subr.bf16.mxu0 0
    %302 = vmatpush1.bf16.xpose.msra.mxu0 0
    %303 = vmatprep.subr.bf16.mxu0 0
    %304 = vmatpush1.bf16.xpose.msra.mxu0 0
    %305 = vmatprep.subr.bf16.mxu0 0
    %306 = vmatpush1.bf16.xpose.msra.mxu0 0
    %307 = vmatprep.subr.bf16.mxu0 0
    %308 = vmatpush1.bf16.xpose.msra.mxu0 0
    %309 = vmatprep.subr.bf16.mxu0 0
    %310 = vmatpush1.bf16.xpose.msra.mxu0 0
    %311 = vmatprep.subr.bf16.mxu0 0
    %312 = vmatpush1.bf16.xpose.msra.mxu0 0
    %313 = vmatprep.subr.bf16.mxu0 0
    %314 = vmatpush1.bf16.xpose.msra.mxu0 0
    %315 = vmatprep.subr.bf16.mxu0 0
    %316 = vmatpush1.bf16.xpose.msra.mxu0 0
    %317 = vmatprep.mubr.bf16.mxu0 0
    %318 = vmatmul.mubr.bf16.gmra.mrb[0].mxu0 %v120
    %v319 = vpop.f32.mrb[0].mxu0
    %v320 = vadd.f32 %v267, %v319
    %v321 = vpop.f32.mrb[0].mxu0
    %v322 = vpop.f32.mrb[0].mxu0
    %v323 = vadd.f32 %v267, %v322
    %v324 = vpop.f32.mrb[0].mxu0
    %325 = vdwg.mxu0
    %v326 = vpack.c.bf16 %v323, %v320
    %v328 = vunpack.c.l.b16 %v326
    %v329 = vunpack.c.h.b16 %v326
    %v330 = vpack.c.b16 %v328, %v328
    %v331 = vpack.c.b16 %v329, %v329
    %334 = vst.msk [vmem:[#allocation13] sm:$0xf] %vm177, %v330
    %335 = vst.msk [vmem:[#allocation13 + $0x4] sm:$0xf] %vm177, %v331
    %v336 = vld [vmem:[%s4] sm:$0x3]
    %v337 = vld [vmem:[%s8] sm:$0x1]
    %v339 = vlaneseq
    %v340 = vshrl.u32 %v339, 7
    %v341 = vsub.s32 0, %v340
    %v342 = vrot.slane %v337, %v341
    %v345 = vsel %vm118, %v336, 0
    %347 = vmatprep.subr.bf16.mxu0 0
    %348 = vmatpush1.bf16.xpose.msra.mxu0 %v345
    %349 = vmatprep.subr.bf16.mxu0 0
    %350 = vmatpush1.bf16.xpose.msra.mxu0 0
    %351 = vmatprep.subr.bf16.mxu0 0
    %352 = vmatpush1.bf16.xpose.msra.mxu0 0
    %353 = vmatprep.subr.bf16.mxu0 0
    %354 = vmatpush1.bf16.xpose.msra.mxu0 0
    %355 = vmatprep.subr.bf16.mxu0 0
    %356 = vmatpush1.bf16.xpose.msra.mxu0 0
    %357 = vmatprep.subr.bf16.mxu0 0
    %358 = vmatpush1.bf16.xpose.msra.mxu0 0
    %359 = vmatprep.subr.bf16.mxu0 0
    %360 = vmatpush1.bf16.xpose.msra.mxu0 0
    %361 = vmatprep.subr.bf16.mxu0 0
    %362 = vmatpush1.bf16.xpose.msra.mxu0 0
    %363 = vmatprep.subr.bf16.mxu0 0
    %364 = vmatpush1.bf16.xpose.msra.mxu0 0
    %365 = vmatprep.subr.bf16.mxu0 0
    %366 = vmatpush1.bf16.xpose.msra.mxu0 0
    %367 = vmatprep.subr.bf16.mxu0 0
    %368 = vmatpush1.bf16.xpose.msra.mxu0 0
    %369 = vmatprep.subr.bf16.mxu0 0
    %370 = vmatpush1.bf16.xpose.msra.mxu0 0
    %371 = vmatprep.subr.bf16.mxu0 0
    %372 = vmatpush1.bf16.xpose.msra.mxu0 0
    %373 = vmatprep.subr.bf16.mxu0 0
    %374 = vmatpush1.bf16.xpose.msra.mxu0 0
    %375 = vmatprep.subr.bf16.mxu0 0
    %376 = vmatpush1.bf16.xpose.msra.mxu0 0
    %377 = vmatprep.subr.bf16.mxu0 0
    %378 = vmatpush1.bf16.xpose.msra.mxu0 0
    %379 = vmatprep.mubr.bf16.mxu0 0
    %380 = vmatmul.mubr.bf16.gmra.mrb[0].mxu0 %v120
    %v381 = vpop.f32.mrb[0].mxu0
    %v382 = vadd.f32 %v342, %v381
    %v383 = vpop.f32.mrb[0].mxu0
    %v384 = vpop.f32.mrb[0].mxu0
    %v385 = vadd.f32 %v342, %v384
    %v386 = vpop.f32.mrb[0].mxu0
    %387 = vdwg.mxu0
    %vm388 = vcmask 31744
    %389 = vst.msk [vmem:[%s12] sm:$0xff] %vm388, %v382
    %390 = vst.msk [vmem:[%s12 + $0x8] sm:$0xff] %vm388, %v385
    // Predicated region
    $region54: #{tpu_custom_call.1} parent=1 // pred_check
      _
    $region55: #{tpu_custom_call.1} parent=1 // pred_check_branch
      %392 = sbr.rel (0) target = $region57
    $region56: #{tpu_custom_call.1} parent=1 // pred_region
      %s394 = ssub.s32 128, 128
      %395 = vsyncadd [#allocation4], %s394
      %s396 = sshll.u32 [#allocation10], 4
      %s397 = int_to_ptr.vmem [resolvable:$true] %s396
      %402 = dma.vmem_to_hbm [thread:$0]  %s397, 128, %s9, [#allocation4], 64, 64, 4
    $region57: #{tpu_custom_call.1} parent=1 // pred_fallthru
      _
    // Predicated region
    $region58: #{tpu_custom_call.1} parent=1 // pred_check
      _
    $region59: #{tpu_custom_call.1} parent=1 // pred_check_branch
      %404 = sbr.rel (0) target = $region61
    $region60: #{tpu_custom_call.1} parent=1 // pred_region
      %s406 = ssub.s32 128, 128
      %407 = vsyncadd [#allocation12], %s406
      %s408 = sshll.u32 [#allocation11], 4
      %s409 = int_to_ptr.vmem [resolvable:$true] %s408
      %414 = dma.vmem_to_hbm [thread:$0]  %s409, 128, %s10, [#allocation12], 64, 64, 4
    $region61: #{tpu_custom_call.1} parent=1 // pred_fallthru
      _
    // Predicated region
    $region62: #{tpu_custom_call.1} parent=1 // pred_check
      _
    $region63: #{tpu_custom_call.1} parent=1 // pred_check_branch
      %416 = sbr.rel (0) target = $region65
    $region64: #{tpu_custom_call.1} parent=1 // pred_region
      %s418 = ssub.s32 128, 128
      %419 = vsyncadd [#allocation12], %s418
      %s420 = sshll.u32 [#allocation13], 4
      %s421 = int_to_ptr.vmem [resolvable:$true] %s420
      %426 = dma.vmem_to_hbm [thread:$0]  %s421, 128, %s11, [#allocation12], 64, 64, 4
    $region65: #{tpu_custom_call.1} parent=1 // pred_fallthru
      _
    // Predicated region
    $region66: #{tpu_custom_call.1} parent=1 // pred_check
      _
    $region67: #{tpu_custom_call.1} parent=1 // pred_check_branch
      %428 = sbr.rel (0) target = $region69
    $region68: #{tpu_custom_call.1} parent=1 // pred_region
      _
    $region69: #{tpu_custom_call.1} parent=1 // pred_fallthru
      _
    // Predicated region
    $region70: #{tpu_custom_call.1} parent=1 // pred_check
      _
    $region71: #{tpu_custom_call.1} parent=1 // pred_check_branch
      %430 = sbr.rel (0) target = $region73
    $region72: #{tpu_custom_call.1} parent=1 // pred_region
      %431 = dma.done [#allocation4], 128
    $region73: #{tpu_custom_call.1} parent=1 // pred_fallthru
      _
    // Predicated region
    $region74: #{tpu_custom_call.1} parent=1 // pred_check
      _
    $region75: #{tpu_custom_call.1} parent=1 // pred_check_branch
      %433 = sbr.rel (0) target = $region77
    $region76: #{tpu_custom_call.1} parent=1 // pred_region
      %434 = dma.done [#allocation12], 128
    $region77: #{tpu_custom_call.1} parent=1 // pred_fallthru
      _
    // Predicated region
    $region78: #{tpu_custom_call.1} parent=1 // pred_check
      _
    $region79: #{tpu_custom_call.1} parent=1 // pred_check_branch
      %436 = sbr.rel (0) target = $region81
    $region80: #{tpu_custom_call.1} parent=1 // pred_region
      %437 = dma.done [#allocation12], 128
    $region81: #{tpu_custom_call.1} parent=1 // pred_fallthru
      _
    // Predicated region
    $region82: #{tpu_custom_call.1} parent=1 // pred_check
      _
    $region83: #{tpu_custom_call.1} parent=1 // pred_check_branch
      %439 = sbr.rel (0) target = $region85
    $region84: #{tpu_custom_call.1} parent=1 // pred_region
      _
    $region85: #{tpu_custom_call.1} parent=1 // pred_fallthru
      _
    %440 = vsyncpa [#allocation3], 1
    %441 = vsyncpa [#allocation6], 1
    %442 = vsyncpa [#allocation9], 1
    %443 = vsyncpa [#allocation4], 1
    %444 = vsyncpa [#allocation12], 1

</llo_original>
